<compile_context>
chip_gen: v6e
topology: v6e:2x2x1
jax: 0.10.0
libtpu: 0.0.40
codegen_flags: <defaults>
</compile_context>

<pallas_src>
import functools
import math

import jax
import jax.numpy as jnp
from jax.experimental import pallas as pl
from jax.experimental.pallas import tpu as pltpu

MATMUL_DTYPE = jnp.bfloat16          # MXU input dtype (all accumulation in f32)
VMEM_LIMIT = 32 * 1024 * 1024        # safe on v5e/v6e (128 MiB) and v7x (64 MiB)


def _round_up(x, m):
    return (x + m - 1) // m * m


# --------------------- generic row-tiled matmul + bias -----------------------
def _matmul_bias_kernel(x_ref, w_ref, b_ref, o_ref):
    o_ref[...] = (jnp.dot(x_ref[...], w_ref[...],
                          preferred_element_type=jnp.float32)
                  + b_ref[...]).astype(o_ref.dtype)


def matmul_bias_pallas(x2, w2, b2, out_dtype=jnp.float32, tile_m=2048):
    """(M, K) @ (K, N) + (1, N) with a 'parallel' grid over M row-tiles."""
    M, K = x2.shape
    N = w2.shape[-1]
    tm = min(tile_m, _round_up(M, 8))
    Mp = _round_up(M, tm)
    x2 = x2.astype(MATMUL_DTYPE)
    if Mp != M:
        x2 = jnp.pad(x2, ((0, Mp - M), (0, 0)))
    out = pl.pallas_call(
        _matmul_bias_kernel,
        out_shape=jax.ShapeDtypeStruct((Mp, N), out_dtype),
        grid=(Mp // tm,),
        in_specs=[
            pl.BlockSpec((tm, K), lambda i: (i, 0)),
            pl.BlockSpec((K, N), lambda i: (0, 0)),
            pl.BlockSpec((1, N), lambda i: (0, 0)),
        ],
        out_specs=pl.BlockSpec((tm, N), lambda i: (i, 0)),
        compiler_params=pltpu.CompilerParams(
            dimension_semantics=("parallel",),
            vmem_limit_bytes=VMEM_LIMIT,
        ),
    )(x2, w2.astype(MATMUL_DTYPE), b2.astype(jnp.float32))
    return out[:M] if Mp != M else out


# ----------------------------- ConvLSTM layer -------------------------------
def _clstm_recurrent_kernel(xg_ref, h0_ref, c0_ref, wh_ref,
                            hy_ref, hfin_ref, cfin_ref, h_scr, c_scr,
                            *, filt, dil, pad, hh, ww, feat, bsz, mm_dtype):
    t = pl.program_id(0)
    bn = bsz * hh * ww

    @pl.when(t == 0)
    def _init():
        # zero the padded borders once, drop the initial state into the interior
        h_scr[...] = jnp.zeros_like(h_scr)
        h_scr[:, pad:pad + hh, pad:pad + ww, :] = h0_ref[...]
        c_scr[...] = c0_ref[...]

    # x-gates (Wx·x + b) were precomputed outside the recurrence.
    gates = xg_ref[0]                               # (B*n, 4F) f32, bias included
    h_bf = h_scr[...].astype(mm_dtype)              # cast once per step

    # state-to-state conv as filt^2 per-tap MXU matmuls, f32 accumulation
    for k in range(filt * filt):
        dy = (k // filt) * dil
        dx = (k % filt) * dil
        hw = h_bf[:, dy:dy + hh, dx:dx + ww, :].reshape(bn, feat)
        gates = gates + jnp.dot(hw, wh_ref[k], preferred_element_type=jnp.float32)

    # gate columns are pre-permuted to (i, f, o, g): one 3F sigmoid, one F tanh
    sig = jax.nn.sigmoid(gates[:, :3 * feat])
    g = jnp.tanh(gates[:, 3 * feat:])
    i_g = sig[:, :feat]
    f_g = sig[:, feat:2 * feat]
    o_g = sig[:, 2 * feat:3 * feat]

    cy = f_g * c_scr[...] + i_g * g
    hy = o_g * jnp.tanh(cy)

    # carry state in VMEM scratch for the next timestep
    c_scr[...] = cy
    h_scr[:, pad:pad + hh, pad:pad + ww, :] = hy.reshape(bsz, hh, ww, feat)

    hy_ref[0] = hy.astype(hy_ref.dtype)             # bf16 inter-layer activation

    @pl.when(t == pl.num_programs(0) - 1)
    def _finalize():
        hfin_ref[...] = hy                          # f32 final states
        cfin_ref[...] = cy


def prep_clstm_params(conv_w, conv_b, in_channels, num_features, filt, dil):
    """One-time parameter prep.

    conv_w: PyTorch Conv2d weight (4F, Cin+F, f, f); conv_b: (4F,).
    Gate columns are permuted from (i, f, g, o) to (i, f, o, g).
    """
    F = num_features
    perm = jnp.concatenate([jnp.arange(0, 2 * F),
                            jnp.arange(3 * F, 4 * F),
                            jnp.arange(2 * F, 3 * F)])
    w = jnp.transpose(conv_w, (2, 3, 1, 0)).reshape(
        filt * filt, in_channels + F, 4 * F)[:, :, perm]
    return dict(
        # im2col weight for the x-gates GEMM: rows are tap-major, channel-minor
        wx2d=w[:, :in_channels, :].reshape(filt * filt * in_channels,
                                           4 * F).astype(MATMUL_DTYPE),
        wh=w[:, in_channels:, :].astype(MATMUL_DTYPE),   # (f*f, F, 4F)
        bias=conv_b[perm].reshape(1, 4 * F).astype(jnp.float32),
        filt=filt, dil=dil, feat=F, cin=in_channels,
    )


def _im2col(x, pad, filt, dil):
    """x: (T, B, H, W, C) -> (T*B*H*W, filt*filt*C) patch matrix (tap-major)."""
    T, B, H, W, C = x.shape
    xp = jnp.pad(x, ((0, 0), (0, 0), (pad, pad), (pad, pad), (0, 0)))
    cols = []
    for k in range(filt * filt):
        dy = (k // filt) * dil
        dx = (k % filt) * dil
        cols.append(xp[:, :, dy:dy + H, dx:dx + W, :])
    return jnp.concatenate(cols, axis=-1).reshape(T * B * H * W, filt * filt * C)


def clstm_layer_forward(x_seq, h0, c0, lp):
    """Run one CLSTMCell over the whole sequence.

    x_seq: (T, B, H, W, Cin) (f32 or bf16), h0/c0: (B, H, W, F) f32.
    Returns hy_seq (T, B*H*W, F) bf16 and final (h, c) each (B, H, W, F) f32.
    """
    T, B, H, W, Cin = x_seq.shape
    filt, dil, feat = lp["filt"], lp["dil"], lp["feat"]
    pad = (filt - 1) * dil // 2
    Hp, Wp = H + 2 * pad, W + 2 * pad
    n = H * W
    bn = B * n

    # ---- x-gates for all (t, b): one big lane-dense im2col GEMM (bias folded)
    patches = _im2col(x_seq, pad, filt, dil)
    xg = matmul_bias_pallas(patches, lp["wx2d"], lp["bias"], jnp.float32)
    xg = xg.reshape(T, bn, 4 * feat)

    h0f = h0.astype(jnp.float32)
    c0f = c0.reshape(bn, feat).astype(jnp.float32)

    kernel = functools.partial(_clstm_recurrent_kernel, filt=filt, dil=dil,
                               pad=pad, hh=H, ww=W, feat=feat, bsz=B,
                               mm_dtype=MATMUL_DTYPE)

    hy_seq, h_fin, c_fin = pl.pallas_call(
        kernel,
        out_shape=(jax.ShapeDtypeStruct((T, bn, feat), MATMUL_DTYPE),
                   jax.ShapeDtypeStruct((bn, feat), jnp.float32),
                   jax.ShapeDtypeStruct((bn, feat), jnp.float32)),
        grid=(T,),
        in_specs=[
            pl.BlockSpec((1, bn, 4 * feat), lambda t: (t, 0, 0)),       # x-gates
            pl.BlockSpec((B, H, W, feat), lambda t: (0, 0, 0, 0)),      # h0
            pl.BlockSpec((bn, feat), lambda t: (0, 0)),                 # c0
            pl.BlockSpec((filt * filt, feat, 4 * feat), lambda t: (0, 0, 0)),
        ],
        out_specs=(
            pl.BlockSpec((1, bn, feat), lambda t: (t, 0, 0)),           # hy_seq
            pl.BlockSpec((bn, feat), lambda t: (0, 0)),                 # final h
            pl.BlockSpec((bn, feat), lambda t: (0, 0)),                 # final c
        ),
        scratch_shapes=[
            pltpu.VMEM((B, Hp, Wp, feat), jnp.float32),  # padded recurrent h
            pltpu.VMEM((bn, feat), jnp.float32),         # recurrent c
        ],
        compiler_params=pltpu.CompilerParams(
            dimension_semantics=("arbitrary",),
            vmem_limit_bytes=VMEM_LIMIT,
        ),
    )(xg, h0f, c0f, lp["wh"])

    return hy_seq, (h_fin.reshape(B, H, W, feat), c_fin.reshape(B, H, W, feat))


# ------------------------------ MCLSTM forward -------------------------------
def mclstm_forward(x_seq, hidden_state, layer_params, out_w2d, out_b2d,
                   return_sequences):
    T, B, H, W, _ = x_seq.shape
    current = x_seq
    next_hidden = []
    hidden_concat = None
    for lp, (h0, c0) in zip(layer_params, hidden_state):
        hy_seq, (h_fin, c_fin) = clstm_layer_forward(current, h0, c0, lp)
        next_hidden.append((h_fin, c_fin))
        current = hy_seq.reshape(T, B, H, W, lp["feat"])   # bf16 inter-layer act.
        hidden_concat = (current if hidden_concat is None
                         else jnp.concatenate([current, hidden_concat], axis=-1))
    if return_sequences:
        Tc, Bc, Hc, Wc, Cs = hidden_concat.shape
        flat = hidden_concat.reshape(Tc * Bc * Hc * Wc, Cs)
        out = matmul_bias_pallas(flat, out_w2d, out_b2d, jnp.float32)
        out = out.reshape(Tc, Bc, Hc, Wc, -1)
    else:
        out = current.astype(jnp.float32)
    return next_hidden, out


# ------------------------------- pure-JAX reference --------------------------
def _clstm_cell_ref(x, h, c, conv_w, conv_b, dil):
    f = conv_w.shape[-1]
    feat = h.shape[-1]
    pad = (f - 1) * dil // 2
    inp = jnp.concatenate([x, h], axis=-1).astype(MATMUL_DTYPE)
    rhs = jnp.transpose(conv_w, (2, 3, 1, 0)).astype(MATMUL_DTYPE)   # HWIO
    gates = jax.lax.conv_general_dilated(
        inp, rhs, window_strides=(1, 1), padding=[(pad, pad), (pad, pad)],
        rhs_dilation=(dil, dil), dimension_numbers=("NHWC", "HWIO", "NHWC"),
        preferred_element_type=jnp.float32) + conv_b.reshape(1, 1, 1, -1)
    i = jax.nn.sigmoid(gates[..., 0 * feat:1 * feat])
    fg = jax.nn.sigmoid(gates[..., 1 * feat:2 * feat])
    g = jnp.tanh(gates[..., 2 * feat:3 * feat])
    o = jax.nn.sigmoid(gates[..., 3 * feat:4 * feat])
    cy = fg * c + i * g
    hy = o * jnp.tanh(cy)
    return hy, cy


def mclstm_forward_ref(x_seq, hidden_state, conv_ws, conv_bs, dils,
                       out_w, out_b, return_sequences):
    T = x_seq.shape[0]
    current = x_seq
    next_hidden = []
    hidden_concat = None
    for l in range(len(conv_ws)):
        h, c = hidden_state[l]
        outs = []
        for t in range(T):
            h, c = _clstm_cell_ref(current[t], h, c, conv_ws[l], conv_bs[l], dils[l])
            outs.append(h)
        next_hidden.append((h, c))
        current = jnp.stack(outs, axis=0)
        hidden_concat = (current if hidden_concat is None
                         else jnp.concatenate([current, hidden_concat], axis=-1))
    if return_sequences:
        Tc, B, H, W, Cs = hidden_concat.shape
        w2d = jnp.transpose(out_w[:, :, 0, 0]).astype(MATMUL_DTYPE)
        flat = hidden_concat.reshape(-1, Cs).astype(MATMUL_DTYPE)
        out = jnp.dot(flat, w2d, preferred_element_type=jnp.float32) + out_b.reshape(1, -1)
        current = out.reshape(Tc, B, H, W, -1)
    return next_hidden, current


# ------------------------------------ main -----------------------------------
if __name__ == "__main__":
    # MCLSTMCell(input_shape=(8,8), input_channels=4, i2s_filter_size=3 (unused,
    # as in the original code), s2s_filter_size_list=[3,3],
    # num_features_list=[8,16], num_layers=2, return_sequences=True, dilation=1)
    T, B = 3, 2
    H, W = 8, 8
    input_channels = 4
    s2s_filter_size_list = [3, 3]
    num_features_list = [8, 16]
    num_layers = 2
    dilation = 1
    return_sequences = True

    key = jax.random.PRNGKey(0)
    keys = list(jax.random.split(key, 16))
    kidx = 0

    conv_ws, conv_bs, dils, layer_params = [], [], [], []
    in_ch = input_channels
    for l in range(num_layers):
        feat = num_features_list[l]
        filt = s2s_filter_size_list[l]
        dil = dilation if l == 0 else 1
        stdv = 1.0 / math.sqrt((in_ch + feat) * filt * filt)
        w = jax.random.uniform(keys[kidx], (4 * feat, in_ch + feat, filt, filt),
                               minval=-stdv, maxval=stdv, dtype=jnp.float32); kidx += 1
        b = jax.random.uniform(keys[kidx], (4 * feat,), minval=-stdv, maxval=stdv,
                               dtype=jnp.float32); kidx += 1
        conv_ws.append(w); conv_bs.append(b); dils.append(dil)
        layer_params.append(prep_clstm_params(w, b, in_ch, feat, filt, dil))
        in_ch = feat

    sum_feat = sum(num_features_list)
    stdv = 1.0 / math.sqrt(sum_feat)
    out_w = jax.random.uniform(keys[kidx], (input_channels, sum_feat, 1, 1),
                               minval=-stdv, maxval=stdv, dtype=jnp.float32); kidx += 1
    out_b = jax.random.uniform(keys[kidx], (input_channels,), minval=-stdv,
                               maxval=stdv, dtype=jnp.float32); kidx += 1
    out_w2d = jnp.transpose(out_w[:, :, 0, 0]).astype(MATMUL_DTYPE)   # (sumF, Cin)
    out_b2d = out_b.reshape(1, -1).astype(jnp.float32)

    x_seq = jax.random.normal(keys[kidx], (T, B, H, W, input_channels),
                              dtype=jnp.float32); kidx += 1
    hidden_state = []
    for l in range(num_layers):
        feat = num_features_list[l]
        h0 = 0.5 * jax.random.normal(keys[kidx], (B, H, W, feat), dtype=jnp.float32); kidx += 1
        c0 = 0.5 * jax.random.normal(keys[kidx], (B, H, W, feat), dtype=jnp.float32); kidx += 1
        hidden_state.append((h0, c0))

    next_hidden, out = mclstm_forward(x_seq, hidden_state, layer_params,
                                      out_w2d, out_b2d, return_sequences)
    jax.block_until_ready((next_hidden, out))

    next_hidden_ref, out_ref = mclstm_forward_ref(x_seq, hidden_state, conv_ws,
                                                  conv_bs, dils, out_w, out_b,
                                                  return_sequences)

    tol = dict(atol=5e-3, rtol=5e-3)
    for l in range(num_layers):
        assert jnp.allclose(next_hidden[l][0], next_hidden_ref[l][0], **tol), f"h mismatch layer {l}"
        assert jnp.allclose(next_hidden[l][1], next_hidden_ref[l][1], **tol), f"c mismatch layer {l}"
    assert jnp.allclose(out, out_ref, **tol), "output sequence mismatch"

    print("KERNEL_OK")
</pallas_src>

<mosaic_0001>
module attributes {stable_mosaic.version = 11 : i64} {
  func.func @_matmul_bias_kernel(%arg0: i32, %arg1: memref<384x36xbf16, #tpu.memory_space<vmem>>, %arg2: memref<36x32xbf16, #tpu.memory_space<vmem>>, %arg3: memref<1x32xf32, #tpu.memory_space<vmem>>, %arg4: memref<384x32xf32, #tpu.memory_space<vmem>>) attributes {dimension_semantics = [#tpu.dimension_semantics<parallel>], iteration_bounds = array<i64: 1>, scalar_prefetch = 0 : i64, scratch_operands = 0 : i64, tpu.core_type = #tpu.core_type<tc>, window_params = [{transform_indices = @transform_0, window_bounds = array<i64: 384, 36>}, {pipeline_mode = #tpu.pipeline_mode<synchronous>, transform_indices = @transform_1, window_bounds = array<i64: 36, 32>}, {pipeline_mode = #tpu.pipeline_mode<synchronous>, transform_indices = @transform_2, window_bounds = array<i64: 1, 32>}, {transform_indices = @transform_3, window_bounds = array<i64: 384, 32>}]} {
    %c0 = arith.constant 0 : index
    %c0_0 = arith.constant 0 : index
    %0 = vector.load %arg1[%c0, %c0_0] : memref<384x36xbf16, #tpu.memory_space<vmem>>, vector<384x36xbf16>
    %c0_1 = arith.constant 0 : index
    %c0_2 = arith.constant 0 : index
    %1 = vector.load %arg2[%c0_1, %c0_2] : memref<36x32xbf16, #tpu.memory_space<vmem>>, vector<36x32xbf16>
    %cst = arith.constant dense<0.000000e+00> : vector<384x32xf32>
    %2 = tpu.matmul %0, %1, %cst {dimension_numbers = #tpu.dot_dimension_numbers<[1], [0], [0], [1], [0, 0, 1, 1], [], []>} : vector<384x36xbf16>, vector<36x32xbf16>, vector<384x32xf32> -> vector<384x32xf32>
    %c0_3 = arith.constant 0 : index
    %c0_4 = arith.constant 0 : index
    %3 = vector.load %arg3[%c0_3, %c0_4] : memref<1x32xf32, #tpu.memory_space<vmem>>, vector<1x32xf32>
    %4 = vector.broadcast %3 : vector<1x32xf32> to vector<384x32xf32>
    %5 = arith.addf %2, %4 : vector<384x32xf32>
    %c0_5 = arith.constant 0 : index
    %c0_6 = arith.constant 0 : index
    %6 = vector.load %arg4[%c0_5, %c0_6] : memref<384x32xf32, #tpu.memory_space<vmem>>, vector<384x32xf32>
    tpu.vector_store %arg4[%c0_5, %c0_6], %5 {strides = array<i32>} : memref<384x32xf32, #tpu.memory_space<vmem>>, vector<384x32xf32>,
    return
  }
  func.func @transform_0(%arg0: i32) -> (i32, i32) {
    %c0_i32 = arith.constant 0 : i32
    %c0_i32_0 = arith.constant 0 : i32
    return %arg0, %c0_i32 : i32, i32
  }
  func.func @transform_1(%arg0: i32) -> (i32, i32) {
    %c0_i32 = arith.constant 0 : i32
    %c0_i32_0 = arith.constant 0 : i32
    %c0_i32_1 = arith.constant 0 : i32
    return %c0_i32, %c0_i32_0 : i32, i32
  }
  func.func @transform_2(%arg0: i32) -> (i32, i32) {
    %c0_i32 = arith.constant 0 : i32
    %c0_i32_0 = arith.constant 0 : i32
    %c0_i32_1 = arith.constant 0 : i32
    return %c0_i32, %c0_i32_0 : i32, i32
  }
  func.func @transform_3(%arg0: i32) -> (i32, i32) {
    %c0_i32 = arith.constant 0 : i32
    %c0_i32_0 = arith.constant 0 : i32
    return %arg0, %c0_i32 : i32, i32
  }
}

</mosaic_0001>

<llo_original>
// kernel: tpu_custom_call.1
$region0: #{tpu_custom_call.1}
  #allocation0 [shape = 'u32[]', space=smem, size = 0x4, offset = 0x4, fixed_abs, tag = 'smem constant byte address 0x4 - core index']
  #allocation1 [shape = 'u32[144,128]{1,0:T(1,128)}', space=vmem, size = 0x12000, scoped, tag = 'internal scratch']
  %s0 = inlined_call_operand.vmem [shape: bf16[384,36], index: 0, kind: input, shape index: {}]
  %s1 = inlined_call_operand.vmem [shape: bf16[36,32], index: 1, kind: input, shape index: {}]
  %s2 = inlined_call_operand.vmem [shape: f32[1,32], index: 2, kind: input, shape index: {}]
  %s3 = inlined_call_operand.vmem [shape: f32[384,32], index: 3, kind: output, shape index: {}]
  %s4 = sld [smem:[#allocation0]]
  $region22: #{tpu_custom_call.1} parent=0
    _
  %s6 = ssub.s32 1, %s4
  %s7 = scalar_select 0, %s6, %s4
  // Predicated region
  $region2: #{tpu_custom_call.1} parent=0 // pred_check
    _
  $region3: #{tpu_custom_call.1} parent=0 // pred_check_branch
    %9 = sbr.rel (0) target = $region5
  $region4: #{tpu_custom_call.1} parent=0 // pred_region
    _
  $region5: #{tpu_custom_call.1} parent=0 // pred_fallthru
    _
  // Predicated region
  $region6: #{tpu_custom_call.1} parent=0 // pred_check
    _
  $region7: #{tpu_custom_call.1} parent=0 // pred_check_branch
    %11 = sbr.rel (0) target = $region9
  $region8: #{tpu_custom_call.1} parent=0 // pred_region
    _
  $region9: #{tpu_custom_call.1} parent=0 // pred_fallthru
    _
  // Predicated region
  $region10: #{tpu_custom_call.1} parent=0 // pred_check
    _
  $region11: #{tpu_custom_call.1} parent=0 // pred_check_branch
    %13 = sbr.rel (0) target = $region13
  $region12: #{tpu_custom_call.1} parent=0 // pred_region
    _
  $region13: #{tpu_custom_call.1} parent=0 // pred_fallthru
    _
  %v15 = vld [vmem:[%s0] sm:$0xf]
  %v16 = vld [vmem:[%s0 + $0x4] sm:$0xf]
  %v17 = vld [vmem:[%s0 + $0x8] sm:$0xf]
  %v18 = vld [vmem:[%s0 + $0xc] sm:$0xf]
  %v19 = vld [vmem:[%s0 + $0x10] sm:$0xf]
  %v20 = vld [vmem:[%s0 + $0x14] sm:$0xf]
  %v21 = vld [vmem:[%s0 + $0x18] sm:$0xf]
  %v22 = vld [vmem:[%s0 + $0x1c] sm:$0xf]
  %v23 = vld [vmem:[%s0 + $0x20] sm:$0xf]
  %v24 = vld [vmem:[%s0 + $0x24] sm:$0xf]
  %v25 = vld [vmem:[%s0 + $0x28] sm:$0xf]
  %v26 = vld [vmem:[%s0 + $0x2c] sm:$0xf]
  %v27 = vld [vmem:[%s0 + $0x30] sm:$0xf]
  %v28 = vld [vmem:[%s0 + $0x34] sm:$0xf]
  %v29 = vld [vmem:[%s0 + $0x38] sm:$0xf]
  %v30 = vld [vmem:[%s0 + $0x3c] sm:$0xf]
  %v31 = vld [vmem:[%s0 + $0x40] sm:$0xf]
  %v32 = vld [vmem:[%s0 + $0x44] sm:$0xf]
  %v33 = vld [vmem:[%s0 + $0x48] sm:$0xf]
  %v34 = vld [vmem:[%s0 + $0x4c] sm:$0xf]
  %v35 = vld [vmem:[%s0 + $0x50] sm:$0xf]
  %v36 = vld [vmem:[%s0 + $0x54] sm:$0xf]
  %v37 = vld [vmem:[%s0 + $0x58] sm:$0xf]
  %v38 = vld [vmem:[%s0 + $0x5c] sm:$0xf]
  %v39 = vld [vmem:[%s0 + $0x60] sm:$0xf]
  %v40 = vld [vmem:[%s0 + $0x64] sm:$0xf]
  %v41 = vld [vmem:[%s0 + $0x68] sm:$0xf]
  %v42 = vld [vmem:[%s0 + $0x6c] sm:$0xf]
  %v43 = vld [vmem:[%s0 + $0x70] sm:$0xf]
  %v44 = vld [vmem:[%s0 + $0x74] sm:$0xf]
  %v45 = vld [vmem:[%s0 + $0x78] sm:$0xf]
  %v46 = vld [vmem:[%s0 + $0x7c] sm:$0xf]
  %v47 = vld [vmem:[%s0 + $0x80] sm:$0xf]
  %v48 = vld [vmem:[%s0 + $0x84] sm:$0xf]
  %v49 = vld [vmem:[%s0 + $0x88] sm:$0xf]
  %v50 = vld [vmem:[%s0 + $0x8c] sm:$0xf]
  %v51 = vld [vmem:[%s0 + $0x90] sm:$0xf]
  %v52 = vld [vmem:[%s0 + $0x94] sm:$0xf]
  %v53 = vld [vmem:[%s0 + $0x98] sm:$0xf]
  %v54 = vld [vmem:[%s0 + $0x9c] sm:$0xf]
  %v55 = vld [vmem:[%s0 + $0xa0] sm:$0xf]
  %v56 = vld [vmem:[%s0 + $0xa4] sm:$0xf]
  %v57 = vld [vmem:[%s0 + $0xa8] sm:$0xf]
  %v58 = vld [vmem:[%s0 + $0xac] sm:$0xf]
  %v59 = vld [vmem:[%s0 + $0xb0] sm:$0xf]
  %v60 = vld [vmem:[%s0 + $0xb4] sm:$0xf]
  %v61 = vld [vmem:[%s0 + $0xb8] sm:$0xf]
  %v62 = vld [vmem:[%s0 + $0xbc] sm:$0xf]
  %v63 = vld [vmem:[%s1] sm:$0xf]
  %v64 = vld [vmem:[%s1 + $0x4] sm:$0xf]
  %v65 = vld [vmem:[%s1 + $0x8] sm:$0xf]
  %v66 = vld [vmem:[%s1 + $0xc] sm:$0xf]
  %v67 = vld [vmem:[%s1 + $0x10] sm:$0x3]
  %v68 = vld [vmem:[%s2] sm:$0x1]
  %v70 = vlaneseq
  %v71 = vshrl.u32 %v70, 7
  %v72 = vsub.s32 0, %v71
  %v73 = vrot.slane %v68, %v72
  %v123 = vunpack.c.l.b16 %v15
  %v124 = vunpack.c.l.b16 %v16
  %v125 = vunpack.c.l.b16 %v17
  %v126 = vunpack.c.l.b16 %v18
  %v127 = vunpack.c.l.b16 %v19
  %v128 = vunpack.c.l.b16 %v20
  %v129 = vunpack.c.l.b16 %v21
  %v130 = vunpack.c.l.b16 %v22
  %v131 = vunpack.c.l.b16 %v23
  %v132 = vunpack.c.l.b16 %v24
  %v133 = vunpack.c.l.b16 %v25
  %v134 = vunpack.c.l.b16 %v26
  %v135 = vunpack.c.l.b16 %v27
  %v136 = vunpack.c.l.b16 %v28
  %v137 = vunpack.c.l.b16 %v29
  %v138 = vunpack.c.l.b16 %v30
  %v139 = vunpack.c.l.b16 %v31
  %v140 = vunpack.c.l.b16 %v32
  %v141 = vunpack.c.l.b16 %v33
  %v142 = vunpack.c.l.b16 %v34
  %v143 = vunpack.c.l.b16 %v35
  %v144 = vunpack.c.l.b16 %v36
  %v145 = vunpack.c.l.b16 %v37
  %v146 = vunpack.c.l.b16 %v38
  %v147 = vunpack.c.l.b16 %v39
  %v148 = vunpack.c.l.b16 %v40
  %v149 = vunpack.c.l.b16 %v41
  %v150 = vunpack.c.l.b16 %v42
  %v151 = vunpack.c.l.b16 %v43
  %v152 = vunpack.c.l.b16 %v44
  %v153 = vunpack.c.l.b16 %v45
  %v154 = vunpack.c.l.b16 %v46
  %v155 = vunpack.c.l.b16 %v47
  %v156 = vunpack.c.l.b16 %v48
  %v157 = vunpack.c.l.b16 %v49
  %v158 = vunpack.c.l.b16 %v50
  %v159 = vunpack.c.l.b16 %v51
  %v160 = vunpack.c.l.b16 %v52
  %v161 = vunpack.c.l.b16 %v53
  %v162 = vunpack.c.l.b16 %v54
  %v163 = vunpack.c.l.b16 %v55
  %v164 = vunpack.c.l.b16 %v56
  %v165 = vunpack.c.l.b16 %v57
  %v166 = vunpack.c.l.b16 %v58
  %v167 = vunpack.c.l.b16 %v59
  %v168 = vunpack.c.l.b16 %v60
  %v169 = vunpack.c.l.b16 %v61
  %v170 = vunpack.c.l.b16 %v62
  %v171 = vpack.c.b16 %v124, %v123
  %v172 = vpack.c.b16 %v126, %v125
  %v173 = vpack.c.b16 %v128, %v127
  %v174 = vpack.c.b16 %v130, %v129
  %v175 = vpack.c.b16 %v132, %v131
  %v176 = vpack.c.b16 %v134, %v133
  %v177 = vpack.c.b16 %v136, %v135
  %v178 = vpack.c.b16 %v138, %v137
  %v179 = vpack.c.b16 %v140, %v139
  %v180 = vpack.c.b16 %v142, %v141
  %v181 = vpack.c.b16 %v144, %v143
  %v182 = vpack.c.b16 %v146, %v145
  %v183 = vpack.c.b16 %v148, %v147
  %v184 = vpack.c.b16 %v150, %v149
  %v185 = vpack.c.b16 %v152, %v151
  %v186 = vpack.c.b16 %v154, %v153
  %v187 = vpack.c.b16 %v156, %v155
  %v188 = vpack.c.b16 %v158, %v157
  %v189 = vpack.c.b16 %v160, %v159
  %v190 = vpack.c.b16 %v162, %v161
  %v191 = vpack.c.b16 %v164, %v163
  %v192 = vpack.c.b16 %v166, %v165
  %v193 = vpack.c.b16 %v168, %v167
  %v194 = vpack.c.b16 %v170, %v169
  %v200 = vunpack.c.l.b16 %v63
  %v201 = vunpack.c.l.b16 %v64
  %v202 = vunpack.c.l.b16 %v65
  %v203 = vunpack.c.l.b16 %v66
  %v204 = vunpack.c.l.b16 %v67
  %v205 = vpack.c.b16 %v201, %v200
  %v206 = vpack.c.b16 %v203, %v202
  %v207 = vpack.c.b16 %v204, %v204
  %vm210 = vcmask 293888
  %v212 = vsel %vm210, %v171, 0
  %v215 = vsel %vm210, %v172, 0
  %v218 = vsel %vm210, %v173, 0
  %v221 = vsel %vm210, %v174, 0
  %v224 = vsel %vm210, %v175, 0
  %v227 = vsel %vm210, %v176, 0
  %v230 = vsel %vm210, %v177, 0
  %v233 = vsel %vm210, %v178, 0
  %v236 = vsel %vm210, %v179, 0
  %v239 = vsel %vm210, %v180, 0
  %v242 = vsel %vm210, %v181, 0
  %v245 = vsel %vm210, %v182, 0
  %v248 = vsel %vm210, %v183, 0
  %v251 = vsel %vm210, %v184, 0
  %v254 = vsel %vm210, %v185, 0
  %v257 = vsel %vm210, %v186, 0
  %v260 = vsel %vm210, %v187, 0
  %v263 = vsel %vm210, %v188, 0
  %v266 = vsel %vm210, %v189, 0
  %v269 = vsel %vm210, %v190, 0
  %v272 = vsel %vm210, %v191, 0
  %v275 = vsel %vm210, %v192, 0
  %v278 = vsel %vm210, %v193, 0
  %v281 = vsel %vm210, %v194, 0
  %vm283 = vcmask 1041408
  %v285 = vsel %vm283, %v207, 0
  %287 = vmatprep.subr.bf16.mxu0 0
  %288 = vmatpush1.bf16.msra.mxu0 0
  %289 = vmatprep.subr.bf16.mxu0 0
  %290 = vmatpush1.bf16.msra.mxu0 0
  %291 = vmatprep.subr.bf16.mxu0 0
  %292 = vmatpush1.bf16.msra.mxu0 0
  %293 = vmatprep.subr.bf16.mxu0 0
  %294 = vmatpush1.bf16.msra.mxu0 0
  %295 = vmatprep.subr.bf16.mxu0 0
  %296 = vmatpush1.bf16.msra.mxu0 0
  %297 = vmatprep.subr.bf16.mxu0 0
  %298 = vmatpush1.bf16.msra.mxu0 %v285
  %299 = vmatprep.subr.bf16.mxu0 0
  %300 = vmatpush1.bf16.msra.mxu0 %v206
  %301 = vmatprep.subr.bf16.mxu0 0
  %302 = vmatpush1.bf16.msra.mxu0 %v205
  %303 = vmatprep.subr.bf16.mxu0 0
  %304 = vmatpush2.bf16.msra.mxu0 0
  %305 = vmatprep.subr.bf16.mxu0 0
  %306 = vmatpush2.bf16.msra.mxu0 0
  %307 = vmatprep.subr.bf16.mxu0 0
  %308 = vmatpush2.bf16.msra.mxu0 0
  %309 = vmatprep.subr.bf16.mxu0 0
  %310 = vmatpush2.bf16.msra.mxu0 0
  %311 = vmatprep.subr.bf16.mxu0 0
  %312 = vmatpush2.bf16.msra.mxu0 0
  %313 = vmatprep.subr.bf16.mxu0 0
  %314 = vmatpush2.bf16.msra.mxu0 0
  %315 = vmatprep.subr.bf16.mxu0 0
  %316 = vmatpush2.bf16.msra.mxu0 0
  %317 = vmatprep.subr.bf16.mxu0 0
  %318 = vmatpush2.bf16.msra.mxu0 0
  %319 = vmatprep.mubr.bf16.mxu0 0
  %320 = vmatmul.mubr.bf16.gmra.mxu0 %v212
  %v321 = vpop.f32.mrf.mxu0
  %v322 = vadd.f32 %v73, %v321
  %v323 = vpop.f32.mrf.mxu0
  %v324 = vpop.f32.mrf.mxu0
  %v325 = vadd.f32 %v73, %v324
  %v326 = vpop.f32.mrf.mxu0
  %327 = vmatprep.mubr.bf16.mxu0 0
  %328 = vmatmul.mubr.bf16.gmra.mxu0 %v215
  %v329 = vpop.f32.mrf.mxu0
  %v330 = vadd.f32 %v73, %v329
  %v331 = vpop.f32.mrf.mxu0
  %v332 = vpop.f32.mrf.mxu0
  %v333 = vadd.f32 %v73, %v332
  %v334 = vpop.f32.mrf.mxu0
  %335 = vmatprep.mubr.bf16.mxu0 0
  %336 = vmatmul.mubr.bf16.gmra.mxu0 %v218
  %v337 = vpop.f32.mrf.mxu0
  %v338 = vadd.f32 %v73, %v337
  %v339 = vpop.f32.mrf.mxu0
  %v340 = vpop.f32.mrf.mxu0
  %v341 = vadd.f32 %v73, %v340
  %v342 = vpop.f32.mrf.mxu0
  %343 = vmatprep.mubr.bf16.mxu0 0
  %344 = vmatmul.mubr.bf16.gmra.mxu0 %v221
  %v345 = vpop.f32.mrf.mxu0
  %v346 = vadd.f32 %v73, %v345
  %v347 = vpop.f32.mrf.mxu0
  %v348 = vpop.f32.mrf.mxu0
  %v349 = vadd.f32 %v73, %v348
  %v350 = vpop.f32.mrf.mxu0
  %351 = vmatprep.mubr.bf16.mxu0 0
  %352 = vmatmul.mubr.bf16.gmra.mxu0 %v224
  %v353 = vpop.f32.mrf.mxu0
  %v354 = vadd.f32 %v73, %v353
  %v355 = vpop.f32.mrf.mxu0
  %v356 = vpop.f32.mrf.mxu0
  %v357 = vadd.f32 %v73, %v356
  %v358 = vpop.f32.mrf.mxu0
  %359 = vmatprep.mubr.bf16.mxu0 0
  %360 = vmatmul.mubr.bf16.gmra.mxu0 %v227
  %v361 = vpop.f32.mrf.mxu0
  %v362 = vadd.f32 %v73, %v361
  %v363 = vpop.f32.mrf.mxu0
  %v364 = vpop.f32.mrf.mxu0
  %v365 = vadd.f32 %v73, %v364
  %v366 = vpop.f32.mrf.mxu0
  %367 = vmatprep.mubr.bf16.mxu0 0
  %368 = vmatmul.mubr.bf16.gmra.mxu0 %v230
  %v369 = vpop.f32.mrf.mxu0
  %v370 = vadd.f32 %v73, %v369
  %v371 = vpop.f32.mrf.mxu0
  %v372 = vpop.f32.mrf.mxu0
  %v373 = vadd.f32 %v73, %v372
  %v374 = vpop.f32.mrf.mxu0
  %375 = vmatprep.mubr.bf16.mxu0 0
  %376 = vmatmul.mubr.bf16.gmra.mxu0 %v233
  %v377 = vpop.f32.mrf.mxu0
  %v378 = vadd.f32 %v73, %v377
  %v379 = vpop.f32.mrf.mxu0
  %v380 = vpop.f32.mrf.mxu0
  %v381 = vadd.f32 %v73, %v380
  %v382 = vpop.f32.mrf.mxu0
  %383 = vmatprep.mubr.bf16.mxu0 0
  %384 = vmatmul.mubr.bf16.gmra.mxu0 %v236
  %v385 = vpop.f32.mrf.mxu0
  %v386 = vadd.f32 %v73, %v385
  %v387 = vpop.f32.mrf.mxu0
  %v388 = vpop.f32.mrf.mxu0
  %v389 = vadd.f32 %v73, %v388
  %v390 = vpop.f32.mrf.mxu0
  %391 = vmatprep.mubr.bf16.mxu0 0
  %392 = vmatmul.mubr.bf16.gmra.mxu0 %v239
  %v393 = vpop.f32.mrf.mxu0
  %v394 = vadd.f32 %v73, %v393
  %v395 = vpop.f32.mrf.mxu0
  %v396 = vpop.f32.mrf.mxu0
  %v397 = vadd.f32 %v73, %v396
  %v398 = vpop.f32.mrf.mxu0
  %399 = vmatprep.mubr.bf16.mxu0 0
  %400 = vmatmul.mubr.bf16.gmra.mxu0 %v242
  %v401 = vpop.f32.mrf.mxu0
  %v402 = vadd.f32 %v73, %v401
  %v403 = vpop.f32.mrf.mxu0
  %v404 = vpop.f32.mrf.mxu0
  %v405 = vadd.f32 %v73, %v404
  %v406 = vpop.f32.mrf.mxu0
  %407 = vmatprep.mubr.bf16.mxu0 0
  %408 = vmatmul.mubr.bf16.gmra.mxu0 %v245
  %v409 = vpop.f32.mrf.mxu0
  %v410 = vadd.f32 %v73, %v409
  %v411 = vpop.f32.mrf.mxu0
  %v412 = vpop.f32.mrf.mxu0
  %v413 = vadd.f32 %v73, %v412
  %v414 = vpop.f32.mrf.mxu0
  %415 = vmatprep.mubr.bf16.mxu0 0
  %416 = vmatmul.mubr.bf16.gmra.mxu0 %v248
  %v417 = vpop.f32.mrf.mxu0
  %v418 = vadd.f32 %v73, %v417
  %v419 = vpop.f32.mrf.mxu0
  %v420 = vpop.f32.mrf.mxu0
  %v421 = vadd.f32 %v73, %v420
  %v422 = vpop.f32.mrf.mxu0
  %423 = vmatprep.mubr.bf16.mxu0 0
  %424 = vmatmul.mubr.bf16.gmra.mxu0 %v251
  %v425 = vpop.f32.mrf.mxu0
  %v426 = vadd.f32 %v73, %v425
  %v427 = vpop.f32.mrf.mxu0
  %v428 = vpop.f32.mrf.mxu0
  %v429 = vadd.f32 %v73, %v428
  %v430 = vpop.f32.mrf.mxu0
  %431 = vmatprep.mubr.bf16.mxu0 0
  %432 = vmatmul.mubr.bf16.gmra.mxu0 %v254
  %v433 = vpop.f32.mrf.mxu0
  %v434 = vadd.f32 %v73, %v433
  %v435 = vpop.f32.mrf.mxu0
  %v436 = vpop.f32.mrf.mxu0
  %v437 = vadd.f32 %v73, %v436
  %v438 = vpop.f32.mrf.mxu0
  %439 = vmatprep.mubr.bf16.mxu0 0
  %440 = vmatmul.mubr.bf16.gmra.mxu0 %v257
  %v441 = vpop.f32.mrf.mxu0
  %v442 = vadd.f32 %v73, %v441
  %v443 = vpop.f32.mrf.mxu0
  %v444 = vpop.f32.mrf.mxu0
  %v445 = vadd.f32 %v73, %v444
  %v446 = vpop.f32.mrf.mxu0
  %447 = vmatprep.mubr.bf16.mxu0 0
  %448 = vmatmul.mubr.bf16.gmra.mxu0 %v260
  %v449 = vpop.f32.mrf.mxu0
  %v450 = vadd.f32 %v73, %v449
  %v451 = vpop.f32.mrf.mxu0
  %v452 = vpop.f32.mrf.mxu0
  %v453 = vadd.f32 %v73, %v452
  %v454 = vpop.f32.mrf.mxu0
  %455 = vmatprep.mubr.bf16.mxu0 0
  %456 = vmatmul.mubr.bf16.gmra.mxu0 %v263
  %v457 = vpop.f32.mrf.mxu0
  %v458 = vadd.f32 %v73, %v457
  %v459 = vpop.f32.mrf.mxu0
  %v460 = vpop.f32.mrf.mxu0
  %v461 = vadd.f32 %v73, %v460
  %v462 = vpop.f32.mrf.mxu0
  %463 = vmatprep.mubr.bf16.mxu0 0
  %464 = vmatmul.mubr.bf16.gmra.mxu0 %v266
  %v465 = vpop.f32.mrf.mxu0
  %v466 = vadd.f32 %v73, %v465
  %v467 = vpop.f32.mrf.mxu0
  %v468 = vpop.f32.mrf.mxu0
  %v469 = vadd.f32 %v73, %v468
  %v470 = vpop.f32.mrf.mxu0
  %471 = vmatprep.mubr.bf16.mxu0 0
  %472 = vmatmul.mubr.bf16.gmra.mxu0 %v269
  %v473 = vpop.f32.mrf.mxu0
  %v474 = vadd.f32 %v73, %v473
  %v475 = vpop.f32.mrf.mxu0
  %v476 = vpop.f32.mrf.mxu0
  %v477 = vadd.f32 %v73, %v476
  %v478 = vpop.f32.mrf.mxu0
  %479 = vmatprep.mubr.bf16.mxu0 0
  %480 = vmatmul.mubr.bf16.gmra.mxu0 %v272
  %v481 = vpop.f32.mrf.mxu0
  %v482 = vadd.f32 %v73, %v481
  %v483 = vpop.f32.mrf.mxu0
  %v484 = vpop.f32.mrf.mxu0
  %v485 = vadd.f32 %v73, %v484
  %v486 = vpop.f32.mrf.mxu0
  %487 = vmatprep.mubr.bf16.mxu0 0
  %488 = vmatmul.mubr.bf16.gmra.mxu0 %v275
  %v489 = vpop.f32.mrf.mxu0
  %v490 = vadd.f32 %v73, %v489
  %v491 = vpop.f32.mrf.mxu0
  %v492 = vpop.f32.mrf.mxu0
  %v493 = vadd.f32 %v73, %v492
  %v494 = vpop.f32.mrf.mxu0
  %495 = vmatprep.mubr.bf16.mxu0 0
  %496 = vmatmul.mubr.bf16.gmra.mxu0 %v278
  %v497 = vpop.f32.mrf.mxu0
  %v498 = vadd.f32 %v73, %v497
  %v499 = vpop.f32.mrf.mxu0
  %v500 = vpop.f32.mrf.mxu0
  %v501 = vadd.f32 %v73, %v500
  %v502 = vpop.f32.mrf.mxu0
  %503 = vmatprep.mubr.bf16.mxu0 0
  %504 = vmatmul.mubr.bf16.gmra.mxu0 %v281
  %v505 = vpop.f32.mrf.mxu0
  %v506 = vadd.f32 %v73, %v505
  %v507 = vpop.f32.mrf.mxu0
  %v508 = vpop.f32.mrf.mxu0
  %v509 = vadd.f32 %v73, %v508
  %v510 = vpop.f32.mrf.mxu0
  %511 = vdwg.mxu0
  %vm512 = vcmask 261120
  %513 = vst.msk [vmem:[%s3] sm:$0xff] %vm512, %v322
  %514 = vst.msk [vmem:[%s3 + $0x8] sm:$0xff] %vm512, %v325
  %515 = vst.msk [vmem:[%s3 + $0x10] sm:$0xff] %vm512, %v330
  %516 = vst.msk [vmem:[%s3 + $0x18] sm:$0xff] %vm512, %v333
  %517 = vst.msk [vmem:[%s3 + $0x20] sm:$0xff] %vm512, %v338
  %518 = vst.msk [vmem:[%s3 + $0x28] sm:$0xff] %vm512, %v341
  %519 = vst.msk [vmem:[%s3 + $0x30] sm:$0xff] %vm512, %v346
  %520 = vst.msk [vmem:[%s3 + $0x38] sm:$0xff] %vm512, %v349
  %521 = vst.msk [vmem:[%s3 + $0x40] sm:$0xff] %vm512, %v354
  %522 = vst.msk [vmem:[%s3 + $0x48] sm:$0xff] %vm512, %v357
  %523 = vst.msk [vmem:[%s3 + $0x50] sm:$0xff] %vm512, %v362
  %524 = vst.msk [vmem:[%s3 + $0x58] sm:$0xff] %vm512, %v365
  %525 = vst.msk [vmem:[%s3 + $0x60] sm:$0xff] %vm512, %v370
  %526 = vst.msk [vmem:[%s3 + $0x68] sm:$0xff] %vm512, %v373
  %527 = vst.msk [vmem:[%s3 + $0x70] sm:$0xff] %vm512, %v378
  %528 = vst.msk [vmem:[%s3 + $0x78] sm:$0xff] %vm512, %v381
  %529 = vst.msk [vmem:[%s3 + $0x80] sm:$0xff] %vm512, %v386
  %530 = vst.msk [vmem:[%s3 + $0x88] sm:$0xff] %vm512, %v389
  %531 = vst.msk [vmem:[%s3 + $0x90] sm:$0xff] %vm512, %v394
  %532 = vst.msk [vmem:[%s3 + $0x98] sm:$0xff] %vm512, %v397
  %533 = vst.msk [vmem:[%s3 + $0xa0] sm:$0xff] %vm512, %v402
  %534 = vst.msk [vmem:[%s3 + $0xa8] sm:$0xff] %vm512, %v405
  %535 = vst.msk [vmem:[%s3 + $0xb0] sm:$0xff] %vm512, %v410
  %536 = vst.msk [vmem:[%s3 + $0xb8] sm:$0xff] %vm512, %v413
  %537 = vst.msk [vmem:[%s3 + $0xc0] sm:$0xff] %vm512, %v418
  %538 = vst.msk [vmem:[%s3 + $0xc8] sm:$0xff] %vm512, %v421
  %539 = vst.msk [vmem:[%s3 + $0xd0] sm:$0xff] %vm512, %v426
  %540 = vst.msk [vmem:[%s3 + $0xd8] sm:$0xff] %vm512, %v429
  %541 = vst.msk [vmem:[%s3 + $0xe0] sm:$0xff] %vm512, %v434
  %542 = vst.msk [vmem:[%s3 + $0xe8] sm:$0xff] %vm512, %v437
  %543 = vst.msk [vmem:[%s3 + $0xf0] sm:$0xff] %vm512, %v442
  %544 = vst.msk [vmem:[%s3 + $0xf8] sm:$0xff] %vm512, %v445
  %545 = vst.msk [vmem:[%s3 + $0x100] sm:$0xff] %vm512, %v450
  %546 = vst.msk [vmem:[%s3 + $0x108] sm:$0xff] %vm512, %v453
  %547 = vst.msk [vmem:[%s3 + $0x110] sm:$0xff] %vm512, %v458
  %548 = vst.msk [vmem:[%s3 + $0x118] sm:$0xff] %vm512, %v461
  %549 = vst.msk [vmem:[%s3 + $0x120] sm:$0xff] %vm512, %v466
  %550 = vst.msk [vmem:[%s3 + $0x128] sm:$0xff] %vm512, %v469
  %551 = vst.msk [vmem:[%s3 + $0x130] sm:$0xff] %vm512, %v474
  %552 = vst.msk [vmem:[%s3 + $0x138] sm:$0xff] %vm512, %v477
  %553 = vst.msk [vmem:[%s3 + $0x140] sm:$0xff] %vm512, %v482
  %554 = vst.msk [vmem:[%s3 + $0x148] sm:$0xff] %vm512, %v485
  %555 = vst.msk [vmem:[%s3 + $0x150] sm:$0xff] %vm512, %v490
  %556 = vst.msk [vmem:[%s3 + $0x158] sm:$0xff] %vm512, %v493
  %557 = vst.msk [vmem:[%s3 + $0x160] sm:$0xff] %vm512, %v498
  %558 = vst.msk [vmem:[%s3 + $0x168] sm:$0xff] %vm512, %v501
  %559 = vst.msk [vmem:[%s3 + $0x170] sm:$0xff] %vm512, %v506
  %560 = vst.msk [vmem:[%s3 + $0x178] sm:$0xff] %vm512, %v509
  // Predicated region
  $region14: #{tpu_custom_call.1} parent=0 // pred_check
    _
  $region15: #{tpu_custom_call.1} parent=0 // pred_check_branch
    %562 = sbr.rel (0) target = $region17
  $region16: #{tpu_custom_call.1} parent=0 // pred_region
    _
  $region17: #{tpu_custom_call.1} parent=0 // pred_fallthru
    _
  // Predicated region
  $region18: #{tpu_custom_call.1} parent=0 // pred_check
    _
  $region19: #{tpu_custom_call.1} parent=0 // pred_check_branch
    %564 = sbr.rel (0) target = $region21
  $region20: #{tpu_custom_call.1} parent=0 // pred_region
    _
  $region21: #{tpu_custom_call.1} parent=0 // pred_fallthru
    _

</llo_original>
